<compile_context>
chip_gen: v6e
topology: v6e:2x2x1
jax: 0.10.0
libtpu: 0.0.40
codegen_flags: <defaults>
</compile_context>

<pallas_src>
import functools

import jax
import jax.numpy as jnp
from jax.experimental import pallas as pl
from jax.experimental.pallas import tpu as pltpu


def _channel_attention_kernel(x_ref, w1_ref, w2_ref, out_ref,
                              acc_sum_ref, acc_max_ref,
                              *, hw, tile_hw, lane, need_mask):
    # x_ref:   [1, C, tile_hw]  one batch row, one spatial tile (native dtype)
    # w1_ref:  [C, Cr]          fc1 weight (transposed), resident
    # w2_ref:  [Cr, C]          fc2 weight (transposed), resident
    # out_ref: [1, 1, C]        sigmoid channel attention for this batch row
    # acc_*:   [1, C, lane]     f32 per-lane partial sum / max accumulators
    k = pl.program_id(1)
    nk = pl.num_programs(1)

    @pl.when(k == 0)
    def _init():
        acc_sum_ref[...] = jnp.zeros(acc_sum_ref.shape, jnp.float32)
        acc_max_ref[...] = jnp.full(acc_max_ref.shape, -jnp.inf, jnp.float32)

    # ---- hot loop: pure streaming reduce (VPU add/max only) ----------------
    n_sub = tile_hw // lane
    s_acc = acc_sum_ref[...]
    m_acc = acc_max_ref[...]
    for j in range(n_sub):  # small, statically unrolled; slices are 128-aligned
        chunk = x_ref[:, :, j * lane:(j + 1) * lane].astype(jnp.float32)
        if need_mask:
            pos = (k * tile_hw + j * lane
                   + jax.lax.broadcasted_iota(jnp.int32, chunk.shape, 2))
            valid = pos < hw
            s_acc = s_acc + jnp.where(valid, chunk, 0.0)
            m_acc = jnp.maximum(m_acc, jnp.where(valid, chunk, -jnp.inf))
        else:
            s_acc = s_acc + chunk
            m_acc = jnp.maximum(m_acc, chunk)
    acc_sum_ref[...] = s_acc
    acc_max_ref[...] = m_acc

    # ---- epilogue: cross-lane reduce + tiny matmuls + sigmoid, once --------
    @pl.when(k == nk - 1)
    def _finalize():
        avg = jnp.sum(acc_sum_ref[...], axis=-1) * jnp.float32(1.0 / hw)  # [1,C]
        mx = jnp.max(acc_max_ref[...], axis=-1)                           # [1,C]
        w1 = w1_ref[...].astype(jnp.float32)
        w2 = w2_ref[...].astype(jnp.float32)
        bb = avg.shape[0]
        stacked = jnp.concatenate([avg, mx], axis=0)                      # [2,C]
        h = jnp.maximum(
            jnp.dot(stacked, w1, preferred_element_type=jnp.float32), 0.0)
        h_comb = h[:bb] + h[bb:]                                          # [1,Cr]
        out = jnp.dot(h_comb, w2, preferred_element_type=jnp.float32)     # [1,C]
        out_ref[...] = jax.nn.sigmoid(out).reshape(
            out_ref.shape).astype(out_ref.dtype)


def _choose_hw_tile(hw, c, itemsize):
    # Keep the double-buffered x block (2 * C * T * itemsize) under ~8 MiB so
    # the pipeline fits every generation's scoped-VMEM default (v5e/v6e/v7x).
    budget = 8 * 1024 * 1024
    t_max = budget // (2 * c * itemsize)
    t_cap = max(512, min(4096, (t_max // 512) * 512))
    if hw <= t_cap:
        return hw            # single full-extent block (always legal)
    return t_cap             # multiple of 512 -> satisfies lane (128) divisibility


def channel_attention(x, w_fc1, w_fc2):
    """x: [B, C, H, W] (NCHW).  w_fc1: [Cr, C, 1, 1].  w_fc2: [C, Cr, 1, 1].

    Returns sigmoid channel attention of shape [B, C, 1, 1] (matches PyTorch).
    """
    B, C, H, W = x.shape
    Cr = w_fc1.shape[0]
    HW = H * W

    x_flat = x.reshape(B, C, HW)
    w1_t = w_fc1.reshape(Cr, C).T          # [C, Cr]
    w2_t = w_fc2.reshape(C, Cr).T          # [Cr, C]

    itemsize = jnp.dtype(x.dtype).itemsize
    tile_hw = _choose_hw_tile(HW, C, itemsize)
    num_k = pl.cdiv(HW, tile_hw)
    lane = 128 if tile_hw % 128 == 0 else tile_hw
    need_mask = (HW % tile_hw) != 0

    kernel = functools.partial(
        _channel_attention_kernel,
        hw=HW, tile_hw=tile_hw, lane=lane, need_mask=need_mask)

    out = pl.pallas_call(
        kernel,
        out_shape=jax.ShapeDtypeStruct((B, 1, C), x.dtype),
        grid_spec=pltpu.PrefetchScalarGridSpec(
            num_scalar_prefetch=0,
            grid=(B, num_k),
            in_specs=[
                pl.BlockSpec((1, C, tile_hw), lambda b, k: (b, 0, k)),
                pl.BlockSpec((C, Cr), lambda b, k: (0, 0)),   # resident weights
                pl.BlockSpec((Cr, C), lambda b, k: (0, 0)),   # resident weights
            ],
            out_specs=pl.BlockSpec((1, 1, C), lambda b, k: (b, 0, 0)),
            scratch_shapes=[
                pltpu.VMEM((1, C, lane), jnp.float32),   # per-lane partial sum
                pltpu.VMEM((1, C, lane), jnp.float32),   # per-lane partial max
            ],
        ),
        compiler_params=pltpu.CompilerParams(
            dimension_semantics=("parallel", "arbitrary"),
            vmem_limit_bytes=32 * 1024 * 1024,
        ),
    )(x_flat, w1_t, w2_t)

    return out.reshape(B, C, 1, 1)


if __name__ == "__main__":
    key = jax.random.PRNGKey(0)
    k_x, k_w1, k_w2 = jax.random.split(key, 3)

    B, C, H, W = 2, 32, 16, 16
    ratio = 8
    Cr = C // ratio

    x = jax.random.normal(k_x, (B, C, H, W), dtype=jnp.float32)
    # Deterministic synthetic weights (PyTorch Conv2d weight shapes, bias=False).
    w_fc1 = jax.random.normal(k_w1, (Cr, C, 1, 1), dtype=jnp.float32) * 0.1
    w_fc2 = jax.random.normal(k_w2, (C, Cr, 1, 1), dtype=jnp.float32) * 0.1

    out = channel_attention(x, w_fc1, w_fc2)
    out = jax.block_until_ready(out)

    # Pure-JAX reference check of forward semantics.
    hi = jax.lax.Precision.HIGHEST
    avg = jnp.mean(x, axis=(2, 3))
    mx = jnp.max(x, axis=(2, 3))
    w1 = w_fc1.reshape(Cr, C)
    w2 = w_fc2.reshape(C, Cr)
    ref = jax.nn.sigmoid(
        jnp.dot(jnp.maximum(jnp.dot(avg, w1.T, precision=hi), 0.0), w2.T, precision=hi)
        + jnp.dot(jnp.maximum(jnp.dot(mx, w1.T, precision=hi), 0.0), w2.T, precision=hi)
    ).reshape(B, C, 1, 1)
    assert out.shape == (B, C, 1, 1)
    assert jnp.allclose(out, ref, atol=1e-5), "mismatch vs reference"

    print("KERNEL_OK")
</pallas_src>

<mosaic_0001>
module attributes {stable_mosaic.version = 11 : i64} {
  func.func @_channel_attention_kernel(%arg0: i32, %arg1: i32, %arg2: memref<1x32x256xf32, #tpu.memory_space<vmem>>, %arg3: memref<32x4xf32, #tpu.memory_space<vmem>>, %arg4: memref<4x32xf32, #tpu.memory_space<vmem>>, %arg5: memref<1x1x32xf32, #tpu.memory_space<vmem>>, %arg6: memref<1x32x128xf32, #tpu.memory_space<vmem>>, %arg7: memref<1x32x128xf32, #tpu.memory_space<vmem>>) attributes {dimension_semantics = [#tpu.dimension_semantics<parallel>, #tpu.dimension_semantics<arbitrary>], iteration_bounds = array<i64: 2, 1>, scalar_prefetch = 0 : i64, scratch_operands = 2 : i64, tpu.core_type = #tpu.core_type<tc>, window_params = [{transform_indices = @transform_0, window_bounds = array<i64: 1, 32, 256>}, {pipeline_mode = #tpu.pipeline_mode<synchronous>, transform_indices = @transform_1, window_bounds = array<i64: 32, 4>}, {pipeline_mode = #tpu.pipeline_mode<synchronous>, transform_indices = @transform_2, window_bounds = array<i64: 4, 32>}, {transform_indices = @transform_3, window_bounds = array<i64: 1, 1, 32>}]} {
    %c0_i32 = arith.constant 0 : i32
    %0 = arith.cmpi eq, %arg1, %c0_i32 : i32
    %1 = arith.extui %0 : i1 to i32
    %c0_i32_0 = arith.constant 0 : i32
    %2 = arith.cmpi ne, %1, %c0_i32_0 : i32
    scf.if %2 {
      %cst = arith.constant 0.000000e+00 : f32
      %16 = vector.broadcast %cst : f32 to vector<1x32x128xf32>
      %c0_19 = arith.constant 0 : index
      %c0_20 = arith.constant 0 : index
      %c0_21 = arith.constant 0 : index
      %17 = vector.load %arg6[%c0_19, %c0_20, %c0_21] : memref<1x32x128xf32, #tpu.memory_space<vmem>>, vector<1x32x128xf32>
      tpu.vector_store %arg6[%c0_19, %c0_20, %c0_21], %16 {strides = array<i32>} : memref<1x32x128xf32, #tpu.memory_space<vmem>>, vector<1x32x128xf32>,
      %cst_22 = arith.constant 0xFF800000 : f32
      %18 = vector.broadcast %cst_22 : f32 to vector<1x32x128xf32>
      %c0_23 = arith.constant 0 : index
      %c0_24 = arith.constant 0 : index
      %c0_25 = arith.constant 0 : index
      %19 = vector.load %arg7[%c0_23, %c0_24, %c0_25] : memref<1x32x128xf32, #tpu.memory_space<vmem>>, vector<1x32x128xf32>
      tpu.vector_store %arg7[%c0_23, %c0_24, %c0_25], %18 {strides = array<i32>} : memref<1x32x128xf32, #tpu.memory_space<vmem>>, vector<1x32x128xf32>,
    } else {
    }
    %c0 = arith.constant 0 : index
    %c0_1 = arith.constant 0 : index
    %c0_2 = arith.constant 0 : index
    %3 = vector.load %arg6[%c0, %c0_1, %c0_2] : memref<1x32x128xf32, #tpu.memory_space<vmem>>, vector<1x32x128xf32>
    %c0_3 = arith.constant 0 : index
    %c0_4 = arith.constant 0 : index
    %c0_5 = arith.constant 0 : index
    %4 = vector.load %arg7[%c0_3, %c0_4, %c0_5] : memref<1x32x128xf32, #tpu.memory_space<vmem>>, vector<1x32x128xf32>
    %c0_6 = arith.constant 0 : index
    %c0_7 = arith.constant 0 : index
    %c0_8 = arith.constant 0 : index
    %5 = vector.load %arg2[%c0_6, %c0_7, %c0_8] : memref<1x32x256xf32, #tpu.memory_space<vmem>>, vector<1x32x128xf32>
    %6 = arith.addf %3, %5 : vector<1x32x128xf32>
    %7 = arith.maximumf %4, %5 : vector<1x32x128xf32>
    %c0_9 = arith.constant 0 : index
    %c0_10 = arith.constant 0 : index
    %c128 = arith.constant 128 : index
    %8 = vector.load %arg2[%c0_9, %c0_10, %c128] : memref<1x32x256xf32, #tpu.memory_space<vmem>>, vector<1x32x128xf32>
    %9 = arith.addf %6, %8 : vector<1x32x128xf32>
    %10 = arith.maximumf %7, %8 : vector<1x32x128xf32>
    %c0_11 = arith.constant 0 : index
    %c0_12 = arith.constant 0 : index
    %c0_13 = arith.constant 0 : index
    %11 = vector.load %arg6[%c0_11, %c0_12, %c0_13] : memref<1x32x128xf32, #tpu.memory_space<vmem>>, vector<1x32x128xf32>
    tpu.vector_store %arg6[%c0_11, %c0_12, %c0_13], %9 {strides = array<i32>} : memref<1x32x128xf32, #tpu.memory_space<vmem>>, vector<1x32x128xf32>,
    %c0_14 = arith.constant 0 : index
    %c0_15 = arith.constant 0 : index
    %c0_16 = arith.constant 0 : index
    %12 = vector.load %arg7[%c0_14, %c0_15, %c0_16] : memref<1x32x128xf32, #tpu.memory_space<vmem>>, vector<1x32x128xf32>
    tpu.vector_store %arg7[%c0_14, %c0_15, %c0_16], %10 {strides = array<i32>} : memref<1x32x128xf32, #tpu.memory_space<vmem>>, vector<1x32x128xf32>,
    %c0_i32_17 = arith.constant 0 : i32
    %13 = arith.cmpi eq, %arg1, %c0_i32_17 : i32
    %14 = arith.extui %13 : i1 to i32
    %c0_i32_18 = arith.constant 0 : i32
    %15 = arith.cmpi ne, %14, %c0_i32_18 : i32
    scf.if %15 {
      %c0_19 = arith.constant 0 : index
      %c0_20 = arith.constant 0 : index
      %c0_21 = arith.constant 0 : index
      %16 = vector.load %arg6[%c0_19, %c0_20, %c0_21] : memref<1x32x128xf32, #tpu.memory_space<vmem>>, vector<1x32x128xf32>
      %cst = arith.constant dense<0.000000e+00> : vector<1x32xf32>
      %17 = vector.multi_reduction <add>, %16, %cst [2] : vector<1x32x128xf32> to vector<1x32xf32>
      %cst_22 = arith.constant 3.906250e-03 : f32
      %18 = vector.broadcast %cst_22 : f32 to vector<1x32xf32>
      %19 = arith.mulf %17, %18 : vector<1x32xf32>
      %c0_23 = arith.constant 0 : index
      %c0_24 = arith.constant 0 : index
      %c0_25 = arith.constant 0 : index
      %20 = vector.load %arg7[%c0_23, %c0_24, %c0_25] : memref<1x32x128xf32, #tpu.memory_space<vmem>>, vector<1x32x128xf32>
      %cst_26 = arith.constant dense<0xFF800000> : vector<1x32xf32>
      %21 = vector.multi_reduction <maximumf>, %20, %cst_26 [2] : vector<1x32x128xf32> to vector<1x32xf32>
      %c0_27 = arith.constant 0 : index
      %c0_28 = arith.constant 0 : index
      %22 = vector.load %arg3[%c0_27, %c0_28] : memref<32x4xf32, #tpu.memory_space<vmem>>, vector<32x4xf32>
      %c0_29 = arith.constant 0 : index
      %c0_30 = arith.constant 0 : index
      %23 = vector.load %arg4[%c0_29, %c0_30] : memref<4x32xf32, #tpu.memory_space<vmem>>, vector<4x32xf32>
      %24 = tpu.concatenate %19, %21 in 0 : vector<1x32xf32>, vector<1x32xf32> -> vector<2x32xf32>
      %cst_31 = arith.constant dense<0.000000e+00> : vector<2x4xf32>
      %25 = tpu.matmul %24, %22, %cst_31 {dimension_numbers = #tpu.dot_dimension_numbers<[1], [0], [0], [1], [0, 0, 1, 1], [], []>} : vector<2x32xf32>, vector<32x4xf32>, vector<2x4xf32> -> vector<2x4xf32>
      %cst_32 = arith.constant 0.000000e+00 : f32
      %26 = vector.broadcast %cst_32 : f32 to vector<2x4xf32>
      %27 = arith.maximumf %25, %26 : vector<2x4xf32>
      %28 = vector.extract_strided_slice %27 {offsets = [0, 0], sizes = [1, 4], strides = [1, 1]} : vector<2x4xf32> to vector<1x4xf32>
      %29 = vector.extract_strided_slice %27 {offsets = [1, 0], sizes = [1, 4], strides = [1, 1]} : vector<2x4xf32> to vector<1x4xf32>
      %30 = arith.addf %28, %29 : vector<1x4xf32>
      %cst_33 = arith.constant dense<0.000000e+00> : vector<1x32xf32>
      %31 = tpu.matmul %30, %23, %cst_33 {dimension_numbers = #tpu.dot_dimension_numbers<[1], [0], [0], [1], [0, 0, 1, 1], [], []>} : vector<1x4xf32>, vector<4x32xf32>, vector<1x32xf32> -> vector<1x32xf32>
      %32 = arith.negf %31 : vector<1x32xf32>
      %33 = math.exp %32 : vector<1x32xf32>
      %cst_34 = arith.constant 1.000000e+00 : f32
      %34 = vector.broadcast %cst_34 : f32 to vector<1x32xf32>
      %35 = arith.addf %34, %33 : vector<1x32xf32>
      %36 = arith.divf %34, %35 : vector<1x32xf32>
      %37 = vector.shape_cast %36 : vector<1x32xf32> to vector<1x1x32xf32>
      %c0_35 = arith.constant 0 : index
      %c0_36 = arith.constant 0 : index
      %c0_37 = arith.constant 0 : index
      %38 = vector.load %arg5[%c0_35, %c0_36, %c0_37] : memref<1x1x32xf32, #tpu.memory_space<vmem>>, vector<1x1x32xf32>
      tpu.vector_store %arg5[%c0_35, %c0_36, %c0_37], %37 {strides = array<i32>} : memref<1x1x32xf32, #tpu.memory_space<vmem>>, vector<1x1x32xf32>,
    } else {
    }
    return
  }
  func.func @transform_0(%arg0: i32, %arg1: i32) -> (i32, i32, i32) {
    %c0_i32 = arith.constant 0 : i32
    %c0_i32_0 = arith.constant 0 : i32
    return %arg0, %c0_i32, %arg1 : i32, i32, i32
  }
  func.func @transform_1(%arg0: i32, %arg1: i32) -> (i32, i32) {
    %c0_i32 = arith.constant 0 : i32
    %c0_i32_0 = arith.constant 0 : i32
    %c0_i32_1 = arith.constant 0 : i32
    return %c0_i32, %c0_i32_0 : i32, i32
  }
  func.func @transform_2(%arg0: i32, %arg1: i32) -> (i32, i32) {
    %c0_i32 = arith.constant 0 : i32
    %c0_i32_0 = arith.constant 0 : i32
    %c0_i32_1 = arith.constant 0 : i32
    return %c0_i32, %c0_i32_0 : i32, i32
  }
  func.func @transform_3(%arg0: i32, %arg1: i32) -> (i32, i32, i32) {
    %c0_i32 = arith.constant 0 : i32
    %c0_i32_0 = arith.constant 0 : i32
    %c0_i32_1 = arith.constant 0 : i32
    return %arg0, %c0_i32, %c0_i32_0 : i32, i32, i32
  }
}

</mosaic_0001>

<llo_original>
// kernel: tpu_custom_call.1
$region0: #{tpu_custom_call.1}
  #allocation0 [shape = 'u32[]', space=smem, size = 0x4, offset = 0x4, fixed_abs, tag = 'smem constant byte address 0x4 - core index']
  #allocation1 [shape = 'u32[144,128]{1,0:T(1,128)}', space=vmem, size = 0x12000, scoped, tag = 'internal scratch']
  #allocation2 [shape = 'f32[1,32,128]{2,1,0:T(8,128)}', space=vmem, size = 0x4000, scoped, tag = 'scratch operand']
  #allocation3 [shape = 'f32[1,32,128]{2,1,0:T(8,128)}', space=vmem, size = 0x4000, scoped, tag = 'scratch operand']
  %s0 = inlined_call_operand.hbm [shape: f32[2,32,256], index: 0, kind: input, shape index: {}]
  %s1 = inlined_call_operand.vmem [shape: f32[32,4], index: 1, kind: input, shape index: {}]
  %s2 = inlined_call_operand.vmem [shape: f32[4,32], index: 2, kind: input, shape index: {}]
  %s3 = inlined_call_operand.hbm [shape: f32[2,1,32], index: 3, kind: output, shape index: {}]
  %s4 = sld [smem:[#allocation0]]
  $region57: #{tpu_custom_call.1} parent=0
    _
  %s6 = ssub.s32 1, %s4
  %s7 = scalar_select 0, %s6, %s4
  $region1: #{tpu_custom_call.1} parent=0
    #allocation4 [shape = 'u8[65536]{0}', space=vmem, size = 0x10000, scoped, tag = 'input window, operand 0']
    #allocation5 [shape = 's32[2]{0}', space=sflag, size = 0x8, scoped, tag = 'scoped memory for tpu_custom_call.1']
    #allocation6 [shape = 's32[2]{0}', space=sflag, size = 0x8, scoped, tag = 'scoped memory for tpu_custom_call.1']
    #allocation7 [shape = 'u8[1024]{0}', space=vmem, size = 0x400, scoped, tag = 'output window, operand 0']
    %8 = vsyncpa [#allocation5], 0
    %s9 = scalar_lea.sflag [#allocation5], 1
    %10 = vsyncpa %s9, 0
    %11 = vsyncpa [#allocation6], 0
    %s12 = scalar_lea.sflag [#allocation6], 1
    %13 = vsyncpa %s12, 0
    loop: start=0, step=1, limit=4
    $region2: #{tpu_custom_call.1} parent=1 // loop_pre_header
      _
    $region3: #{tpu_custom_call.1} parent=1 // loop_header
      %s15 = sphi 0, %s19
      %p16 = scmp.ge.s32.totalorder %s15, 4
      %s22 = sphi 0, %s34
      %s23 = sphi 0, %s30
      %s24 = sphi 0, %s22
      %s25 = sphi 0, %s23
      %s26 = sphi 0, %s24
      %s27 = sphi 0, %s25
      %s39 = sphi 0, %s41
      %s42 = sphi 0, %s39
      %s43 = sphi 0, %s42
      %s59 = sphi 0, %s43
      %s63 = sphi 0, %s63
      %s65 = sphi 0, %s63
      %s66 = sphi 0, %s65
      %s80 = sphi 0, %s66
      %s84 = sphi 0, %s84
      %s86 = sphi 0, %s84
      %s87 = sphi 0, %s86
      %s101 = sphi 0, %s87
      %s107 = sphi 0, %s109
      %s110 = sphi 0, %s107
      %s111 = sphi 0, %s110
      %s127 = sphi 0, %s111
    $region4: #{tpu_custom_call.1} parent=1 // loop_header_branch
      %18 = sbr.rel (%p16) target = $region8
    $region5: #{tpu_custom_call.1} parent=1 // loop_body
      %s20 = ssub.s32 %s15, 1
      %s21 = ssub.s32 %s15, 2
      %s28 = sadd.s32 1, %s23
      %p29 = scmp.ge.s32.totalorder %s28, 1
      %s30 = scalar_select %p29, 0, %s28
      %s31 = sadd.s32 1, %s22
      %s32 = scalar_select %p29, %s31, %s22
      %p33 = scmp.ge.s32.totalorder %s32, 2
      %s34 = scalar_select %p33, 0, %s32
      %s35 = ssub.s32 %s22, %s34
      %s36 = ssub.s32 %s23, %s30
      %s37 = sor.u32 %s35, %s36
      %p38 = scmp.eq.s32.totalorder %s37, 0
      %s40 = sadd.s32 %s39, 1
      %s41 = scalar_select %p38, %s39, %s40
      %p44 = pneg %p38
      %p45 = scmp.eq.s32.totalorder %s15, 1
      %p46 = por %p44, %p45
      %p47 = scmp.ne.s32.totalorder %s39, %s42
      %p48 = scmp.eq.s32.totalorder %s15, 0
      %p49 = por %p47, %p48
      %p50 = scmp.ne.s32.totalorder %s39, %s42
      %p51 = scmp.eq.s32.totalorder %s20, 1
      %p52 = por %p50, %p51
      %p53 = scmp.ne.s32.totalorder %s42, %s43
      %p54 = scmp.eq.s32.totalorder %s20, 0
      %p55 = por %p53, %p54
      %p56 = scmp.ne.s32.totalorder %s42, %s43
      %p57 = scmp.eq.s32.totalorder %s21, 1
      %p58 = por %p56, %p57
      %p60 = scmp.ne.s32.totalorder %s43, %s59
      %p61 = scmp.eq.s32.totalorder %s21, 0
      %p62 = por %p60, %p61
      %s64 = sadd.s32 %s63, 1
      %p67 = scmp.eq.s32.totalorder %s15, 1
      %p68 = scmp.ne.s32.totalorder %s63, %s65
      %p69 = scmp.eq.s32.totalorder %s15, 0
      %p70 = por %p68, %p69
      %p71 = scmp.ne.s32.totalorder %s63, %s65
      %p72 = scmp.eq.s32.totalorder %s20, 1
      %p73 = por %p71, %p72
      %p74 = scmp.ne.s32.totalorder %s65, %s66
      %p75 = scmp.eq.s32.totalorder %s20, 0
      %p76 = por %p74, %p75
      %p77 = scmp.ne.s32.totalorder %s65, %s66
      %p78 = scmp.eq.s32.totalorder %s21, 1
      %p79 = por %p77, %p78
      %p81 = scmp.ne.s32.totalorder %s66, %s80
      %p82 = scmp.eq.s32.totalorder %s21, 0
      %p83 = por %p81, %p82
      %s85 = sadd.s32 %s84, 1
      %p88 = scmp.eq.s32.totalorder %s15, 1
      %p89 = scmp.ne.s32.totalorder %s84, %s86
      %p90 = scmp.eq.s32.totalorder %s15, 0
      %p91 = por %p89, %p90
      %p92 = scmp.ne.s32.totalorder %s84, %s86
      %p93 = scmp.eq.s32.totalorder %s20, 1
      %p94 = por %p92, %p93
      %p95 = scmp.ne.s32.totalorder %s86, %s87
      %p96 = scmp.eq.s32.totalorder %s20, 0
      %p97 = por %p95, %p96
      %p98 = scmp.ne.s32.totalorder %s86, %s87
      %p99 = scmp.eq.s32.totalorder %s21, 1
      %p100 = por %p98, %p99
      %p102 = scmp.ne.s32.totalorder %s87, %s101
      %p103 = scmp.eq.s32.totalorder %s21, 0
      %p104 = por %p102, %p103
      %s105 = ssub.s32 %s22, %s34
      %p106 = scmp.eq.s32.totalorder %s105, 0
      %s108 = sadd.s32 %s107, 1
      %s109 = scalar_select %p106, %s107, %s108
      %p112 = pneg %p106
      %p113 = scmp.eq.s32.totalorder %s15, 1
      %p114 = por %p112, %p113
      %p115 = scmp.ne.s32.totalorder %s107, %s110
      %p116 = scmp.eq.s32.totalorder %s15, 0
      %p117 = por %p115, %p116
      %p118 = scmp.ne.s32.totalorder %s107, %s110
      %p119 = scmp.eq.s32.totalorder %s20, 1
      %p120 = por %p118, %p119
      %p121 = scmp.ne.s32.totalorder %s110, %s111
      %p122 = scmp.eq.s32.totalorder %s20, 0
      %p123 = por %p121, %p122
      %p124 = scmp.ne.s32.totalorder %s110, %s111
      %p125 = scmp.eq.s32.totalorder %s21, 1
      %p126 = por %p124, %p125
      %p128 = scmp.ne.s32.totalorder %s111, %s127
      %p129 = scmp.eq.s32.totalorder %s21, 0
      %p130 = por %p128, %p129
      %p131 = scmp.le.s32.totalorder 1, %s15
      %p132 = scmp.lt.s32.totalorder %s15, 3
      %p133 = pnand %p131, %p132
      %p134 = pneg %p133
      // Predicated region
      $region9: #{tpu_custom_call.1} parent=5 // pred_check
        _
      $region10: #{tpu_custom_call.1} parent=5 // pred_check_branch
        %136 = sbr.rel (%p133) target = $region12
      $region11: #{tpu_custom_call.1} parent=5 // pred_region
        %s137 = ssub.s32 %s15, 1
        // Predicated region
        $region13: #{tpu_custom_call.1} parent=11 // pred_check
          %p138 = pneg %p76
        $region14: #{tpu_custom_call.1} parent=11 // pred_check_branch
          %140 = sbr.rel (%p138) target = $region16
        $region15: #{tpu_custom_call.1} parent=11 // pred_region
          _
        $region16: #{tpu_custom_call.1} parent=11 // pred_fallthru
          _
        // Predicated region
        $region17: #{tpu_custom_call.1} parent=11 // pred_check
          %p141 = pneg %p97
        $region18: #{tpu_custom_call.1} parent=11 // pred_check_branch
          %143 = sbr.rel (%p141) target = $region20
        $region19: #{tpu_custom_call.1} parent=11 // pred_region
          _
        $region20: #{tpu_custom_call.1} parent=11 // pred_fallthru
          _
      $region12: #{tpu_custom_call.1} parent=5 // pred_fallthru
        _
      %p144 = scmp.lt.s32.totalorder %s15, 2
      // Predicated region
      $region21: #{tpu_custom_call.1} parent=5 // pred_check
        %p145 = pneg %p144
      $region22: #{tpu_custom_call.1} parent=5 // pred_check_branch
        %147 = sbr.rel (%p145) target = $region24
      $region23: #{tpu_custom_call.1} parent=5 // pred_region
        // Predicated region
        $region25: #{tpu_custom_call.1} parent=23 // pred_check
          %p148 = pneg %p49
        $region26: #{tpu_custom_call.1} parent=23 // pred_check_branch
          %150 = sbr.rel (%p148) target = $region28
        $region27: #{tpu_custom_call.1} parent=23 // pred_region
          %s151 = sand.u32 %s39, 1
          %s152 = scalar_lea.sflag [#allocation5], %s151
          %s153 = sand.u32 %s39, 1
          %s154 = smul.addr %s153, 64
          %s155 = scalar_lea.vmem [#allocation4], %s154
          %s156 = smul.u32 2, %s23
          %s158 = ssub.s32 1024, 1024
          %159 = vsyncadd %s152, %s158
          %s160 = smul.addr %s22, 8
          %s161 = sadd.s32 %s156, %s160
          %s162 = smul.addr %s161, 128
          %s163 = scalar_lea.hbm %s0, %s162
          %s164 = sshll.u32 %s155, 4
          %s165 = int_to_ptr.vmem [resolvable:$true] %s164
          %170 = dma.hbm_to_vmem [thread:$0]  %s163, 1024, %s165, %s152, 256, 256, 16
        $region28: #{tpu_custom_call.1} parent=23 // pred_fallthru
          _
      $region24: #{tpu_custom_call.1} parent=5 // pred_fallthru
        _
      %p171 = scmp.le.s32.totalorder 1, %s15
      %p172 = scmp.lt.s32.totalorder %s15, 3
      %p173 = pnand %p171, %p172
      %p174 = pneg %p173
      // Predicated region
      $region29: #{tpu_custom_call.1} parent=5 // pred_check
        _
      $region30: #{tpu_custom_call.1} parent=5 // pred_check_branch
        %176 = sbr.rel (%p173) target = $region32
      $region31: #{tpu_custom_call.1} parent=5 // pred_region
        %s177 = ssub.s32 %s15, 1
        %s178 = sand.u32 %s42, 1
        %s179 = scalar_lea.sflag [#allocation5], %s178
        %s180 = sand.u32 %s42, 1
        %s181 = smul.addr %s180, 64
        %s182 = scalar_lea.vmem [#allocation4], %s181
        // Predicated region
        $region33: #{tpu_custom_call.1} parent=31 // pred_check
          %p183 = pneg %p55
        $region34: #{tpu_custom_call.1} parent=31 // pred_check_branch
          %185 = sbr.rel (%p183) target = $region36
        $region35: #{tpu_custom_call.1} parent=31 // pred_region
          %186 = dma.done %s179, 1024
        $region36: #{tpu_custom_call.1} parent=31 // pred_fallthru
          _
        %s187 = sand.u32 %s42, 1
        %s188 = scalar_lea.sflag [#allocation5], %s187
        %s189 = sand.u32 %s42, 1
        %s190 = smul.addr %s189, 64
        %s191 = scalar_lea.vmem [#allocation4], %s190
        %p192 = pneg %p55
        %p193 = pneg %p52
        %p194 = pneg %p76
        %p195 = pneg %p73
        %p196 = pneg %p97
        %p197 = pneg %p94
        %p198 = pneg %p123
        %p199 = pneg %p120
        %s200 = sand.u32 %s110, 1
        %s201 = scalar_lea.sflag [#allocation6], %s200
        %s202 = sand.u32 %s110, 1
        %s203 = scalar_lea.vmem [#allocation7], %s202
        %s204 = smul.u32 2, %s25
        %p205 = scmp.eq.s32.totalorder %s25, 0
        // Predicated region
        $region37: #{tpu_custom_call.1} parent=31 // pred_check
          %p206 = pneg %p205
        $region38: #{tpu_custom_call.1} parent=31 // pred_check_branch
          %208 = sbr.rel (%p206) target = $region40
        $region39: #{tpu_custom_call.1} parent=31 // pred_region
          %209 = vst [vmem:[#allocation2] sm:$0xff] 0.0
          %210 = vst [vmem:[#allocation2 + $0x8] sm:$0xff] 0.0
          %211 = vst [vmem:[#allocation2 + $0x10] sm:$0xff] 0.0
          %212 = vst [vmem:[#allocation2 + $0x18] sm:$0xff] 0.0
          %213 = vst [vmem:[#allocation3] sm:$0xff] -inf
          %214 = vst [vmem:[#allocation3 + $0x8] sm:$0xff] -inf
          %215 = vst [vmem:[#allocation3 + $0x10] sm:$0xff] -inf
          %216 = vst [vmem:[#allocation3 + $0x18] sm:$0xff] -inf
        $region40: #{tpu_custom_call.1} parent=31 // pred_fallthru
          _
        %v217 = vld [vmem:[#allocation2] sm:$0xff]
        %v218 = vld [vmem:[#allocation2 + $0x8] sm:$0xff]
        %v219 = vld [vmem:[#allocation2 + $0x10] sm:$0xff]
        %v220 = vld [vmem:[#allocation2 + $0x18] sm:$0xff]
        %v221 = vld [vmem:[#allocation3] sm:$0xff]
        %v222 = vld [vmem:[#allocation3 + $0x8] sm:$0xff]
        %v223 = vld [vmem:[#allocation3 + $0x10] sm:$0xff]
        %v224 = vld [vmem:[#allocation3 + $0x18] sm:$0xff]
        %v225 = vld [vmem:[%s182] sm:$0xff]
        %v226 = vld [vmem:[%s182 + $0x10] sm:$0xff]
        %v227 = vld [vmem:[%s182 + $0x20] sm:$0xff]
        %v228 = vld [vmem:[%s182 + $0x30] sm:$0xff]
        %v229 = vadd.f32 %v217, %v225
        %v230 = vadd.f32 %v218, %v226
        %v231 = vadd.f32 %v219, %v227
        %v232 = vadd.f32 %v220, %v228
        %v233 = vmax.f32 %v221, %v225
        %v234 = vmax.f32 %v222, %v226
        %v235 = vmax.f32 %v223, %v227
        %v236 = vmax.f32 %v224, %v228
        %v237 = vld [vmem:[%s182 + $0x8] sm:$0xff]
        %v238 = vld [vmem:[%s182 + $0x18] sm:$0xff]
        %v239 = vld [vmem:[%s182 + $0x28] sm:$0xff]
        %v240 = vld [vmem:[%s182 + $0x38] sm:$0xff]
        %v241 = vadd.f32 %v229, %v237
        %v242 = vadd.f32 %v230, %v238
        %v243 = vadd.f32 %v231, %v239
        %v244 = vadd.f32 %v232, %v240
        %v245 = vmax.f32 %v233, %v237
        %v246 = vmax.f32 %v234, %v238
        %v247 = vmax.f32 %v235, %v239
        %v248 = vmax.f32 %v236, %v240
        %249 = vst [vmem:[#allocation2] sm:$0xff] %v241
        %250 = vst [vmem:[#allocation2 + $0x8] sm:$0xff] %v242
        %251 = vst [vmem:[#allocation2 + $0x10] sm:$0xff] %v243
        %252 = vst [vmem:[#allocation2 + $0x18] sm:$0xff] %v244
        %253 = vst [vmem:[#allocation3] sm:$0xff] %v245
        %254 = vst [vmem:[#allocation3 + $0x8] sm:$0xff] %v246
        %255 = vst [vmem:[#allocation3 + $0x10] sm:$0xff] %v247
        %256 = vst [vmem:[#allocation3 + $0x18] sm:$0xff] %v248
        // Predicated region
        $region41: #{tpu_custom_call.1} parent=31 // pred_check
          %p257 = pneg %p205
        $region42: #{tpu_custom_call.1} parent=31 // pred_check_branch
          %259 = sbr.rel (%p257) target = $region44
        $region43: #{tpu_custom_call.1} parent=31 // pred_region
          %v260 = vld [vmem:[#allocation2] sm:$0xff]
          %v261 = vld [vmem:[#allocation2 + $0x8] sm:$0xff]
          %v262 = vld [vmem:[#allocation2 + $0x10] sm:$0xff]
          %v263 = vld [vmem:[#allocation2 + $0x18] sm:$0xff]
          %264 = vadd.xlane.f32.xlu0 %v260
          %v265 = vpop.xlane.xlu0 %264
          %266 = vadd.xlane.f32.xlu0 %v261
          %v267 = vpop.xlane.xlu0 %266
          %268 = vadd.xlane.f32.xlu0 %v262
          %v269 = vpop.xlane.xlu0 %268
          %270 = vadd.xlane.f32.xlu0 %v263
          %v271 = vpop.xlane.xlu0 %270
          %v272 = vmul.f32 %v265, 0.00390625
          %v273 = vmul.f32 %v267, 0.00390625
          %v274 = vmul.f32 %v269, 0.00390625
          %v275 = vmul.f32 %v271, 0.00390625
          %v276 = vld [vmem:[#allocation3] sm:$0xff]
          %v277 = vld [vmem:[#allocation3 + $0x8] sm:$0xff]
          %v278 = vld [vmem:[#allocation3 + $0x10] sm:$0xff]
          %v279 = vld [vmem:[#allocation3 + $0x18] sm:$0xff]
          %280 = vmax.xlane.f32.xlu0 %v276
          %v281 = vpop.xlane.xlu0 %280
          %282 = vmax.xlane.f32.xlu0 %v277
          %v283 = vpop.xlane.xlu0 %282
          %284 = vmax.xlane.f32.xlu0 %v278
          %v285 = vpop.xlane.xlu0 %284
          %286 = vmax.xlane.f32.xlu0 %v279
          %v287 = vpop.xlane.xlu0 %286
          %v288 = vld [vmem:[%s1] sm:$0xff]
          %v289 = vld [vmem:[%s1 + $0x8] sm:$0xff]
          %v290 = vld [vmem:[%s1 + $0x10] sm:$0xff]
          %v291 = vld [vmem:[%s1 + $0x18] sm:$0xff]
          %v292 = vld [vmem:[%s2] sm:$0xf]
          %v297 = vlaneseq
          %v298 = vand.u32 %v297, 127
          %v299 = vlaneseq
          %v300 = vshrl.u32 %v299, 7
          %v301 = vsub.s32 %v298, %v300
          %v302 = vrot.slane %v272, %v301
          %v303 = vadd.s32 %v298, 4294967288
          %v304 = vlaneseq
          %v305 = vshrl.u32 %v304, 7
          %v306 = vsub.s32 %v303, %v305
          %v307 = vrot.slane %v273, %v306
          %vm308 = vcmask 130112
          %v309 = vsel %vm308, %v307, %v302
          %v310 = vadd.s32 %v298, 4294967280
          %v311 = vlaneseq
          %v312 = vshrl.u32 %v311, 7
          %v313 = vsub.s32 %v310, %v312
          %v314 = vrot.slane %v274, %v313
          %vm315 = vcmask 195712
          %v316 = vsel %vm315, %v314, %v309
          %v317 = vadd.s32 %v298, 4294967272
          %v318 = vlaneseq
          %v319 = vshrl.u32 %v318, 7
          %v320 = vsub.s32 %v317, %v319
          %v321 = vrot.slane %v275, %v320
          %vm322 = vcmask 261312
          %v323 = vsel %vm322, %v321, %v316
          %v329 = vlaneseq
          %v330 = vshrl.u32 %v329, 7
          %v331 = vsub.s32 %v298, %v330
          %v332 = vrot.slane %v281, %v331
          %v333 = vlaneseq
          %v334 = vshrl.u32 %v333, 7
          %v335 = vsub.s32 %v303, %v334
          %v336 = vrot.slane %v283, %v335
          %v337 = vsel %vm308, %v336, %v332
          %v338 = vlaneseq
          %v339 = vshrl.u32 %v338, 7
          %v340 = vsub.s32 %v310, %v339
          %v341 = vrot.slane %v285, %v340
          %v342 = vsel %vm315, %v341, %v337
          %v343 = vlaneseq
          %v344 = vshrl.u32 %v343, 7
          %v345 = vsub.s32 %v317, %v344
          %v346 = vrot.slane %v287, %v345
          %v347 = vsel %vm322, %v346, %v342
          %vm349 = vcmask 1040384
          %v350 = vsel %vm349, %v323, %v347
          %vm351 = vcmask 261120
          %v353 = vsel %vm351, %v350, 0
          %355 = vmatprep.subr.mxu0 0.0
          %356 = vmatpush1.msra.mxu0 0.0
          %357 = vmatprep.subr.mxu0 0.0
          %358 = vmatpush1.msra.mxu0 0.0
          %359 = vmatprep.subr.mxu0 0.0
          %360 = vmatpush1.msra.mxu0 0.0
          %361 = vmatprep.subr.mxu0 0.0
          %362 = vmatpush1.msra.mxu0 0.0
          %363 = vmatprep.subr.mxu0 0.0
          %364 = vmatpush1.msra.mxu0 0.0
          %365 = vmatprep.subr.mxu0 0.0
          %366 = vmatpush1.msra.mxu0 0.0
          %367 = vmatprep.subr.mxu0 0.0
          %368 = vmatpush1.msra.mxu0 0.0
          %369 = vmatprep.subr.mxu0 0.0
          %370 = vmatpush1.msra.mxu0 0.0
          %371 = vmatprep.subr.mxu0 0.0
          %372 = vmatpush1.msra.mxu0 0.0
          %373 = vmatprep.subr.mxu0 0.0
          %374 = vmatpush1.msra.mxu0 0.0
          %375 = vmatprep.subr.mxu0 0.0
          %376 = vmatpush1.msra.mxu0 0.0
          %377 = vmatprep.subr.mxu0 0.0
          %378 = vmatpush1.msra.mxu0 0.0
          %379 = vmatprep.subr.mxu0 0.0
          %380 = vmatpush1.msra.mxu0 %v291
          %381 = vmatprep.subr.mxu0 0.0
          %382 = vmatpush1.msra.mxu0 %v290
          %383 = vmatprep.subr.mxu0 0.0
          %384 = vmatpush1.msra.mxu0 %v289
          %385 = vmatprep.subr.mxu0 0.0
          %386 = vmatpush1.msra.mxu0 %v288
          %387 = vmatprep.subr.mxu0 0.0
          %388 = vmatpush2.msra.mxu0 0.0
          %389 = vmatprep.subr.mxu0 0.0
          %390 = vmatpush2.msra.mxu0 0.0
          %391 = vmatprep.subr.mxu0 0.0
          %392 = vmatpush2.msra.mxu0 0.0
          %393 = vmatprep.subr.mxu0 0.0
          %394 = vmatpush2.msra.mxu0 0.0
          %395 = vmatprep.subr.mxu0 0.0
          %396 = vmatpush2.msra.mxu0 0.0
          %397 = vmatprep.subr.mxu0 0.0
          %398 = vmatpush2.msra.mxu0 0.0
          %399 = vmatprep.subr.mxu0 0.0
          %400 = vmatpush2.msra.mxu0 0.0
          %401 = vmatprep.subr.mxu0 0.0
          %402 = vmatpush2.msra.mxu0 0.0
          %403 = vmatprep.subr.mxu0 0.0
          %404 = vmatpush2.msra.mxu0 0.0
          %405 = vmatprep.subr.mxu0 0.0
          %406 = vmatpush2.msra.mxu0 0.0
          %407 = vmatprep.subr.mxu0 0.0
          %408 = vmatpush2.msra.mxu0 0.0
          %409 = vmatprep.subr.mxu0 0.0
          %410 = vmatpush2.msra.mxu0 0.0
          %411 = vmatprep.subr.mxu0 0.0
          %412 = vmatpush2.msra.mxu0 0.0
          %413 = vmatprep.subr.mxu0 0.0
          %414 = vmatpush2.msra.mxu0 0.0
          %415 = vmatprep.subr.mxu0 0.0
          %416 = vmatpush2.msra.mxu0 0.0
          %417 = vmatprep.subr.mxu0 0.0
          %418 = vmatpush2.msra.mxu0 0.0
          %419 = vmatprep.mubr.f32.mxu0 0.0
          %420 = vmatmul.mubr.f32.gmra.mxu0 %v353
          %v421 = vpop.f32.mrf.mxu0
          %v422 = vadd.f32 0.0, %v421
          %v423 = vpop.f32.mrf.mxu0
          %424 = vdwg.mxu0
          %v425 = vmax.f32 %v422, 0.0
          %v427 = vrot.slane %v425, 1
          %v429 = vadd.f32 %v425, %v427
          %vm430 = vcmask 31744
          %v432 = vsel %vm430, %v429, 0
          %vm434 = vcmask 1043456
          %v436 = vsel %vm434, %v292, 0
          %438 = vmatprep.subr.mxu0 0.0
          %439 = vmatpush1.msra.mxu0 0.0
          %440 = vmatprep.subr.mxu0 0.0
          %441 = vmatpush1.msra.mxu0 0.0
          %442 = vmatprep.subr.mxu0 0.0
          %443 = vmatpush1.msra.mxu0 0.0
          %444 = vmatprep.subr.mxu0 0.0
          %445 = vmatpush1.msra.mxu0 0.0
          %446 = vmatprep.subr.mxu0 0.0
          %447 = vmatpush1.msra.mxu0 0.0
          %448 = vmatprep.subr.mxu0 0.0
          %449 = vmatpush1.msra.mxu0 0.0
          %450 = vmatprep.subr.mxu0 0.0
          %451 = vmatpush1.msra.mxu0 0.0
          %452 = vmatprep.subr.mxu0 0.0
          %453 = vmatpush1.msra.mxu0 0.0
          %454 = vmatprep.subr.mxu0 0.0
          %455 = vmatpush1.msra.mxu0 0.0
          %456 = vmatprep.subr.mxu0 0.0
          %457 = vmatpush1.msra.mxu0 0.0
          %458 = vmatprep.subr.mxu0 0.0
          %459 = vmatpush1.msra.mxu0 0.0
          %460 = vmatprep.subr.mxu0 0.0
          %461 = vmatpush1.msra.mxu0 0.0
          %462 = vmatprep.subr.mxu0 0.0
          %463 = vmatpush1.msra.mxu0 0.0
          %464 = vmatprep.subr.mxu0 0.0
          %465 = vmatpush1.msra.mxu0 0.0
          %466 = vmatprep.subr.mxu0 0.0
          %467 = vmatpush1.msra.mxu0 0.0
          %468 = vmatprep.subr.mxu0 0.0
          %469 = vmatpush1.msra.mxu0 %v436
          %470 = vmatprep.subr.mxu0 0.0
          %471 = vmatpush2.msra.mxu0 0.0
          %472 = vmatprep.subr.mxu0 0.0
          %473 = vmatpush2.msra.mxu0 0.0
          %474 = vmatprep.subr.mxu0 0.0
          %475 = vmatpush2.msra.mxu0 0.0
          %476 = vmatprep.subr.mxu0 0.0
          %477 = vmatpush2.msra.mxu0 0.0
          %478 = vmatprep.subr.mxu0 0.0
          %479 = vmatpush2.msra.mxu0 0.0
          %480 = vmatprep.subr.mxu0 0.0
          %481 = vmatpush2.msra.mxu0 0.0
          %482 = vmatprep.subr.mxu0 0.0
          %483 = vmatpush2.msra.mxu0 0.0
          %484 = vmatprep.subr.mxu0 0.0
          %485 = vmatpush2.msra.mxu0 0.0
          %486 = vmatprep.subr.mxu0 0.0
          %487 = vmatpush2.msra.mxu0 0.0
          %488 = vmatprep.subr.mxu0 0.0
          %489 = vmatpush2.msra.mxu0 0.0
          %490 = vmatprep.subr.mxu0 0.0
          %491 = vmatpush2.msra.mxu0 0.0
          %492 = vmatprep.subr.mxu0 0.0
          %493 = vmatpush2.msra.mxu0 0.0
          %494 = vmatprep.subr.mxu0 0.0
          %495 = vmatpush2.msra.mxu0 0.0
          %496 = vmatprep.subr.mxu0 0.0
          %497 = vmatpush2.msra.mxu0 0.0
          %498 = vmatprep.subr.mxu0 0.0
          %499 = vmatpush2.msra.mxu0 0.0
          %500 = vmatprep.subr.mxu0 0.0
          %501 = vmatpush2.msra.mxu0 0.0
          %502 = vmatprep.mubr.f32.mxu0 0.0
          %503 = vmatmul.mubr.f32.gmra.mxu0 %v432
          %v504 = vpop.f32.mrf.mxu0
          %v505 = vadd.f32 0.0, %v504
          %v506 = vpop.f32.mrf.mxu0
          %507 = vdwg.mxu0
          %v508 = vxor.u32 %v505, 2147483648
          %v509 = vmul.f32 %v508, 1.442695
          %v510 = vpow.pop %v509
          %v511 = vadd.f32 %v510, 1.0
          %v512 = vrcp.pop %v511
          %v513 = vmul.f32 1.0, %v512
          %vm514 = vcmask 253952
          %515 = vst.msk [vmem:[%s203] sm:$0x1] %vm514, %v513
        $region44: #{tpu_custom_call.1} parent=31 // pred_fallthru
          _
        %s516 = sand.u32 %s110, 1
        %s517 = scalar_lea.sflag [#allocation6], %s516
        %s518 = sand.u32 %s110, 1
        %s519 = scalar_lea.vmem [#allocation7], %s518
        // Predicated region
        $region45: #{tpu_custom_call.1} parent=31 // pred_check
          %p520 = pneg %p120
        $region46: #{tpu_custom_call.1} parent=31 // pred_check_branch
          %522 = sbr.rel (%p520) target = $region48
        $region47: #{tpu_custom_call.1} parent=31 // pred_region
          %s524 = ssub.s32 16, 16
          %525 = vsyncadd %s517, %s524
          %s526 = smul.addr %s24, 16
          %s527 = scalar_lea.hbm %s3, %s526
          %s529 = sshll.u32 %s519, 4
          %s530 = int_to_ptr.vmem [resolvable:$true] %s529
          %532 = dma.vmem_to_hbm [thread:$0]  %s530, 16, %s527, %s517
        $region48: #{tpu_custom_call.1} parent=31 // pred_fallthru
          _
      $region32: #{tpu_custom_call.1} parent=5 // pred_fallthru
        _
      %p533 = scmp.le.s32.totalorder 2, %s15
      // Predicated region
      $region49: #{tpu_custom_call.1} parent=5 // pred_check
        %p534 = pneg %p533
      $region50: #{tpu_custom_call.1} parent=5 // pred_check_branch
        %536 = sbr.rel (%p534) target = $region52
      $region51: #{tpu_custom_call.1} parent=5 // pred_region
        %s537 = ssub.s32 %s15, 2
        // Predicated region
        $region53: #{tpu_custom_call.1} parent=51 // pred_check
          %p538 = pneg %p126
        $region54: #{tpu_custom_call.1} parent=51 // pred_check_branch
          %540 = sbr.rel (%p538) target = $region56
        $region55: #{tpu_custom_call.1} parent=51 // pred_region
          %s541 = sand.u32 %s111, 1
          %s542 = scalar_lea.sflag [#allocation6], %s541
          %s543 = sand.u32 %s111, 1
          %s544 = scalar_lea.vmem [#allocation7], %s543
          %545 = dma.done %s542, 16
        $region56: #{tpu_custom_call.1} parent=51 // pred_fallthru
          _
      $region52: #{tpu_custom_call.1} parent=5 // pred_fallthru
        _
    $region6: #{tpu_custom_call.1} parent=1 // loop_footer
      %s19 = sadd.s32 1, %s15
    $region7: #{tpu_custom_call.1} parent=1 // loop_footer_branch
      %14 = sbr.rel target = $region3
    $region8: #{tpu_custom_call.1} parent=1 // loop_exit
      _
    %546 = vsyncpa [#allocation5], 1
    %s547 = scalar_lea.sflag [#allocation5], 1
    %548 = vsyncpa %s547, 1
    %549 = vsyncpa [#allocation6], 1
    %s550 = scalar_lea.sflag [#allocation6], 1
    %551 = vsyncpa %s550, 1

</llo_original>
